<compile_context>
chip_gen: v7x
topology: tpu7x:2x2x1
jax: 0.10.0
libtpu: 0.0.40
codegen_flags: <defaults>
</compile_context>

<pallas_src>
import functools

import jax
import jax.numpy as jnp
from jax import lax
from jax.experimental import pallas as pl
from jax.experimental.pallas import tpu as pltpu


def _reduce_to_lane_row(prod, out_dtype):
    """(tile_b, D) -> (1, tile_b): sum over D on the MXU, lane-dense output row."""
    D = prod.shape[-1]
    ones = jnp.ones((8, D), jnp.float32)
    # TODO(synk): verify via pl.lower_as_mlir that this transposed-RHS
    # contraction does not materialize an XLU transpose of the (tile_b, D)
    # tile; if it does, benchmark a (tile_b, 1) column-output reduce instead.
    dots = lax.dot_general(
        ones, prod.astype(jnp.float32),
        dimension_numbers=(((1,), (1,)), ((), ())),  # contract D with D -> (8, tile_b)
        preferred_element_type=jnp.float32,
    )
    # All 8 rows are identical; keep one lane-dense row.
    return jax.nn.sigmoid(dots[0:1, :]).astype(out_dtype)


def _onehot_kernel(idx_ref, emb_ref, o_ref):
    # idx_ref: VMEM (tile_b, 2) int32 -- pre-clamped (x, y) road ids for this tile
    # emb_ref: VMEM (R, D)            -- full embedding table, resident across grid
    # o_ref  : VMEM (1, tile_b) f32   -- lane-dense sigmoid(dot) outputs
    tile_b = idx_ref.shape[0]
    R, _ = emb_ref.shape
    emb = emb_ref[...]
    road_ids = lax.broadcasted_iota(jnp.int32, (tile_b, R), 1)
    ox = (road_ids == idx_ref[:, 0:1]).astype(emb.dtype)   # (tile_b, R) one-hot
    oy = (road_ids == idx_ref[:, 1:2]).astype(emb.dtype)
    # Gathers as MXU matmuls (one-hot rows select exact table rows).
    ux = jnp.dot(ox, emb, preferred_element_type=jnp.float32)
    uy = jnp.dot(oy, emb, preferred_element_type=jnp.float32)
    o_ref[...] = _reduce_to_lane_row(ux * uy, o_ref.dtype)


def _loop_kernel(idx_ref, emb_ref, o_ref, prod_ref, *, batch):
    # Large-table fallback: scalar gather loop.
    # idx_ref : SMEM (2 * tile_b,) int32 -- flattened (x, y) pairs for this tile
    # emb_ref : VMEM (R, D)
    # o_ref   : VMEM (1, tile_b) f32
    # prod_ref: VMEM (tile_b, D) f32 scratch (fused gather*gather products)
    tile_b, _ = prod_ref.shape
    base = pl.program_id(0) * tile_b
    rows = jnp.minimum(tile_b, batch - base)   # skip padded tail rows (batch is static)

    @pl.when(rows < tile_b)
    def _():  # deterministic (discarded) values for padded lanes
        prod_ref[...] = jnp.zeros_like(prod_ref)

    def gather_mul(b, carry):
        prod_ref[b, :] = emb_ref[idx_ref[2 * b], :] * emb_ref[idx_ref[2 * b + 1], :]
        return carry

    lax.fori_loop(0, rows, gather_mul, 0)
    o_ref[...] = _reduce_to_lane_row(prod_ref[...], o_ref.dtype)


def _table_spec(R, D, *, single_buffer):
    index_map = lambda i: (0, 0)   # constant -> fetched once, stays VMEM-resident
    if single_buffer:
        # Double-buffering a never-changing block buys nothing; halve its
        # footprint (critical on v7x's 64 MiB/TC VMEM).
        try:
            return pl.BlockSpec((R, D), index_map, pipeline_mode=pl.Buffered(1))
        except Exception:
            pass   # older JAX without pipeline_mode support
    return pl.BlockSpec((R, D), index_map)


def _vmem_limit_bytes(need_bytes):
    try:
        cap = int(pltpu.get_tpu_info().vmem_capacity_bytes)
    except Exception:
        cap = 128 << 20
    cap_with_headroom = (cap // 8) * 7   # ~56 MiB on v7x, ~112 MiB on v5e/v6e
    return int(min(max(need_bytes + (4 << 20), 32 << 20), cap_with_headroom))


def road2vec_forward(x_idx, embedding, *, tile_b=None, onehot_max_roads=2048,
                     table_dtype=None):
    """x_idx: (B, 2) int road ids; embedding: (num_roads, D) -> (B,) float32."""
    B = x_idx.shape[0]
    R, D = embedding.shape

    # TODO(synk): on v6e/v7x pass table_dtype=jnp.bfloat16 for large road graphs
    # (halves the table's VMEM/HBM footprint; native bf16 VPU/MXU), keep f32 on
    # v5e; for tables that exceed the VMEM limit entirely, keep the table in
    # HBM (memory_space=pl.ANY) and DMA-gather rows per tile.
    emb = embedding if table_dtype is None else embedding.astype(table_dtype)
    esize = jnp.dtype(emb.dtype).itemsize

    # Batch tile: large (amortizes ~0.35us/grid-step, taller MXU LHS) but no
    # larger than the padded batch; always a multiple of the 128-lane axis.
    if tile_b is None:
        tile_b = min(512, max(128, ((B + 127) // 128) * 128))
    n_blocks = (B + tile_b - 1) // tile_b
    B_pad = n_blocks * tile_b

    # Clamp once here (VMEM reads have no runtime bounds check); padding is 0.
    idx = jnp.zeros((B_pad, 2), jnp.int32)
    idx = idx.at[:B].set(jnp.clip(x_idx.astype(jnp.int32), 0, R - 1))

    table_bytes = R * D * esize
    single_buffer_table = table_bytes > (4 << 20)
    table_spec = _table_spec(R, D, single_buffer=single_buffer_table)
    table_copies = 1 if single_buffer_table else 2

    use_onehot = R <= onehot_max_roads

    vmem_need = (table_copies * table_bytes   # resident embedding table
                 + 2 * tile_b * 4             # double-buffered lane-dense output row
                 + 2 * 2 * tile_b * 4)        # double-buffered index tiles
    if use_onehot:
        # one-hot temporaries + ux/uy/prod intermediates
        vmem_need += 2 * tile_b * R * 4 + 3 * tile_b * D * 4
        kernel = _onehot_kernel
        idx_arg = idx                                        # (B_pad, 2) int32, VMEM
        idx_spec = pl.BlockSpec((tile_b, 2), lambda i: (i, 0))
        scratch = []
    else:
        vmem_need += tile_b * D * 4
        kernel = functools.partial(_loop_kernel, batch=B)
        idx_arg = idx.reshape(-1)                            # flattened 1-D SMEM blocks
        idx_spec = pl.BlockSpec((2 * tile_b,), lambda i: (i,),
                                memory_space=pltpu.MemorySpace.SMEM)
        scratch = [pltpu.VMEM((tile_b, D), jnp.float32)]

    out = pl.pallas_call(
        kernel,
        out_shape=jax.ShapeDtypeStruct((1, B_pad), jnp.float32),
        grid=(n_blocks,),
        in_specs=[idx_spec, table_spec],
        out_specs=pl.BlockSpec((1, tile_b), lambda i: (0, i)),
        scratch_shapes=scratch,
        compiler_params=pltpu.CompilerParams(
            dimension_semantics=("parallel",),   # batch tiles shard across TCs on v7x
            vmem_limit_bytes=_vmem_limit_bytes(vmem_need),
        ),
    )(idx_arg, emb)

    return out[0, :B]


if __name__ == "__main__":
    num_roads, embed_dim, batch = 64, 128, 8

    key = jax.random.PRNGKey(0)
    k_emb, k_idx = jax.random.split(key)

    # Deterministic parameter init: nn.Embedding default is N(0, 1).
    embedding = jax.random.normal(k_emb, (num_roads, embed_dim), dtype=jnp.float32)
    # Input: (B, 2) road-id pairs (PyTorch uses int64; int32 suffices here).
    x = jax.random.randint(k_idx, (batch, 2), 0, num_roads, dtype=jnp.int32)

    out = jax.block_until_ready(road2vec_forward(x, embedding))

    # Pure-JAX reference for correctness.
    ux = embedding[x[:, 0]]
    uy = embedding[x[:, 1]]
    ref = jax.nn.sigmoid(jnp.sum(ux * uy, axis=1))

    assert out.shape == (batch,), out.shape
    assert jnp.allclose(out, ref, atol=1e-5, rtol=1e-5), (out, ref)
    print("KERNEL_OK")
</pallas_src>

<mosaic_0001>
module attributes {stable_mosaic.version = 11 : i64} {
  func.func @_onehot_kernel(%arg0: i32, %arg1: memref<128x2xi32, #tpu.memory_space<vmem>>, %arg2: memref<64x128xf32, #tpu.memory_space<vmem>>, %arg3: memref<1x128xf32, #tpu.memory_space<vmem>>) attributes {dimension_semantics = [#tpu.dimension_semantics<parallel>], iteration_bounds = array<i64: 1>, scalar_prefetch = 0 : i64, scratch_operands = 0 : i64, tpu.core_type = #tpu.core_type<tc>, window_params = [{transform_indices = @transform_0, window_bounds = array<i64: 128, 2>}, {pipeline_mode = #tpu.pipeline_mode<synchronous>, transform_indices = @transform_1, window_bounds = array<i64: 64, 128>}, {transform_indices = @transform_2, window_bounds = array<i64: 1, 128>}]} {
    %c0 = arith.constant 0 : index
    %c0_0 = arith.constant 0 : index
    %0 = vector.load %arg2[%c0, %c0_0] : memref<64x128xf32, #tpu.memory_space<vmem>>, vector<64x128xf32>
    %1 = tpu.iota {dimensions = array<i32: 1>} : vector<128x64xi32>
    %c0_1 = arith.constant 0 : index
    %c0_2 = arith.constant 0 : index
    %2 = vector.load %arg1[%c0_1, %c0_2] : memref<128x2xi32, #tpu.memory_space<vmem>>, vector<128x1xi32>
    %3 = vector.broadcast %2 : vector<128x1xi32> to vector<128x64xi32>
    %4 = arith.cmpi eq, %1, %3 : vector<128x64xi32>
    %5 = arith.extui %4 : vector<128x64xi1> to vector<128x64xi32>
    %6 = arith.sitofp %5 : vector<128x64xi32> to vector<128x64xf32>
    %c0_3 = arith.constant 0 : index
    %c1 = arith.constant 1 : index
    %7 = vector.load %arg1[%c0_3, %c1] : memref<128x2xi32, #tpu.memory_space<vmem>>, vector<128x1xi32>
    %8 = vector.broadcast %7 : vector<128x1xi32> to vector<128x64xi32>
    %9 = arith.cmpi eq, %1, %8 : vector<128x64xi32>
    %10 = arith.extui %9 : vector<128x64xi1> to vector<128x64xi32>
    %11 = arith.sitofp %10 : vector<128x64xi32> to vector<128x64xf32>
    %cst = arith.constant dense<0.000000e+00> : vector<128x128xf32>
    %12 = tpu.matmul %6, %0, %cst {dimension_numbers = #tpu.dot_dimension_numbers<[1], [0], [0], [1], [0, 0, 1, 1], [], []>} : vector<128x64xf32>, vector<64x128xf32>, vector<128x128xf32> -> vector<128x128xf32>
    %cst_4 = arith.constant dense<0.000000e+00> : vector<128x128xf32>
    %13 = tpu.matmul %11, %0, %cst_4 {dimension_numbers = #tpu.dot_dimension_numbers<[1], [0], [0], [1], [0, 0, 1, 1], [], []>} : vector<128x64xf32>, vector<64x128xf32>, vector<128x128xf32> -> vector<128x128xf32>
    %14 = arith.mulf %12, %13 : vector<128x128xf32>
    %cst_5 = arith.constant 1.000000e+00 : f32
    %15 = vector.broadcast %cst_5 : f32 to vector<8x128xf32>
    %cst_6 = arith.constant dense<0.000000e+00> : vector<8x128xf32>
    %16 = tpu.matmul %15, %14, %cst_6 {dimension_numbers = #tpu.dot_dimension_numbers<[1], [1], [0], [0], [0, 0, 1, 0], [], []>} : vector<8x128xf32>, vector<128x128xf32>, vector<8x128xf32> -> vector<8x128xf32>
    %17 = vector.extract_strided_slice %16 {offsets = [0, 0], sizes = [1, 128], strides = [1, 1]} : vector<8x128xf32> to vector<1x128xf32>
    %18 = arith.negf %17 : vector<1x128xf32>
    %19 = math.exp %18 : vector<1x128xf32>
    %cst_7 = arith.constant 1.000000e+00 : f32
    %20 = vector.broadcast %cst_7 : f32 to vector<1x128xf32>
    %21 = arith.addf %20, %19 : vector<1x128xf32>
    %22 = arith.divf %20, %21 : vector<1x128xf32>
    %c0_8 = arith.constant 0 : index
    %c0_9 = arith.constant 0 : index
    %23 = vector.load %arg3[%c0_8, %c0_9] : memref<1x128xf32, #tpu.memory_space<vmem>>, vector<1x128xf32>
    tpu.vector_store %arg3[%c0_8, %c0_9], %22 {strides = array<i32>} : memref<1x128xf32, #tpu.memory_space<vmem>>, vector<1x128xf32>,
    return
  }
  func.func @transform_0(%arg0: i32) -> (i32, i32) {
    %c0_i32 = arith.constant 0 : i32
    %c0_i32_0 = arith.constant 0 : i32
    return %arg0, %c0_i32 : i32, i32
  }
  func.func @transform_1(%arg0: i32) -> (i32, i32) {
    %c0_i32 = arith.constant 0 : i32
    %c0_i32_0 = arith.constant 0 : i32
    %c0_i32_1 = arith.constant 0 : i32
    return %c0_i32, %c0_i32_0 : i32, i32
  }
  func.func @transform_2(%arg0: i32) -> (i32, i32) {
    %c0_i32 = arith.constant 0 : i32
    %c0_i32_0 = arith.constant 0 : i32
    return %c0_i32, %arg0 : i32, i32
  }
}

</mosaic_0001>

<llo_original>
// kernel: tpu_custom_call.1
$region0: #{tpu_custom_call.1}
  #allocation0 [shape = 'u32[]', space=smem, size = 0x4, offset = 0x4, fixed_abs, tag = 'smem constant byte address 0x4 - core index']
  #allocation1 [shape = 'u32[144,128]{1,0:T(1,128)}', space=vmem, size = 0x12000, scoped, tag = 'internal scratch']
  %s0 = inlined_call_operand.vmem [shape: s32[128,2], index: 0, kind: input, shape index: {}]
  %s1 = inlined_call_operand.vmem [shape: f32[64,128], index: 1, kind: input, shape index: {}]
  %s2 = inlined_call_operand.hbm [shape: f32[1,128], index: 2, kind: output, shape index: {}]
  %s3 = sld [smem:[#allocation0]]
  $region18: #{tpu_custom_call.1} parent=0
    _
  %s5 = ssub.s32 1, %s3
  %s6 = scalar_select 0, %s5, %s3
  $region1: #{tpu_custom_call.1} parent=0
    #allocation2 [shape = 'u8[512]{0}', space=vmem, size = 0x400, scoped, tag = 'output window, operand 0, single buffered']
    #allocation3 [shape = 's32[1]{0}', space=sflag, size = 0x4, scoped, tag = 'scoped memory for tpu_custom_call.1']
    %7 = vsyncpa [#allocation3], 0
    // Predicated region
    $region2: #{tpu_custom_call.1} parent=1 // pred_check
      _
    $region3: #{tpu_custom_call.1} parent=1 // pred_check_branch
      %9 = sbr.rel (0) target = $region5
    $region4: #{tpu_custom_call.1} parent=1 // pred_region
      _
    $region5: #{tpu_custom_call.1} parent=1 // pred_fallthru
      _
    // Predicated region
    $region6: #{tpu_custom_call.1} parent=1 // pred_check
      _
    $region7: #{tpu_custom_call.1} parent=1 // pred_check_branch
      %11 = sbr.rel (0) target = $region9
    $region8: #{tpu_custom_call.1} parent=1 // pred_region
      _
    $region9: #{tpu_custom_call.1} parent=1 // pred_fallthru
      _
    %v12 = vld [vmem:[%s1] sm:$0xff]
    %v13 = vld [vmem:[%s1 + $0x8] sm:$0xff]
    %v14 = vld [vmem:[%s1 + $0x10] sm:$0xff]
    %v15 = vld [vmem:[%s1 + $0x18] sm:$0xff]
    %v16 = vld [vmem:[%s1 + $0x20] sm:$0xff]
    %v17 = vld [vmem:[%s1 + $0x28] sm:$0xff]
    %v18 = vld [vmem:[%s1 + $0x30] sm:$0xff]
    %v19 = vld [vmem:[%s1 + $0x38] sm:$0xff]
    %v20 = vlaneseq
    %v21 = vand.u32 %v20, 127
    %v22 = vld [vmem:[%s0] sm:$0xff]
    %v23 = vld [vmem:[%s0 + $0x8] sm:$0xff]
    %v24 = vld [vmem:[%s0 + $0x10] sm:$0xff]
    %v25 = vld [vmem:[%s0 + $0x18] sm:$0xff]
    %v26 = vld [vmem:[%s0 + $0x20] sm:$0xff]
    %v27 = vld [vmem:[%s0 + $0x28] sm:$0xff]
    %v28 = vld [vmem:[%s0 + $0x30] sm:$0xff]
    %v29 = vld [vmem:[%s0 + $0x38] sm:$0xff]
    %v30 = vld [vmem:[%s0 + $0x40] sm:$0xff]
    %v31 = vld [vmem:[%s0 + $0x48] sm:$0xff]
    %v32 = vld [vmem:[%s0 + $0x50] sm:$0xff]
    %v33 = vld [vmem:[%s0 + $0x58] sm:$0xff]
    %v34 = vld [vmem:[%s0 + $0x60] sm:$0xff]
    %v35 = vld [vmem:[%s0 + $0x68] sm:$0xff]
    %v36 = vld [vmem:[%s0 + $0x70] sm:$0xff]
    %v37 = vld [vmem:[%s0 + $0x78] sm:$0xff]
    %38 = vset.pattern.permute.xlu0 0
    %39 = vperm.xlu0 %38, %v22
    %v40 = vpop.permute.xlu0 %39
    %41 = vset.pattern.permute.xlu0 0
    %42 = vperm.xlu0 %41, %v23
    %v43 = vpop.permute.xlu0 %42
    %44 = vset.pattern.permute.xlu0 0
    %45 = vperm.xlu0 %44, %v24
    %v46 = vpop.permute.xlu0 %45
    %47 = vset.pattern.permute.xlu0 0
    %48 = vperm.xlu0 %47, %v25
    %v49 = vpop.permute.xlu0 %48
    %50 = vset.pattern.permute.xlu0 0
    %51 = vperm.xlu0 %50, %v26
    %v52 = vpop.permute.xlu0 %51
    %53 = vset.pattern.permute.xlu0 0
    %54 = vperm.xlu0 %53, %v27
    %v55 = vpop.permute.xlu0 %54
    %56 = vset.pattern.permute.xlu0 0
    %57 = vperm.xlu0 %56, %v28
    %v58 = vpop.permute.xlu0 %57
    %59 = vset.pattern.permute.xlu0 0
    %60 = vperm.xlu0 %59, %v29
    %v61 = vpop.permute.xlu0 %60
    %62 = vset.pattern.permute.xlu0 0
    %63 = vperm.xlu0 %62, %v30
    %v64 = vpop.permute.xlu0 %63
    %65 = vset.pattern.permute.xlu0 0
    %66 = vperm.xlu0 %65, %v31
    %v67 = vpop.permute.xlu0 %66
    %68 = vset.pattern.permute.xlu0 0
    %69 = vperm.xlu0 %68, %v32
    %v70 = vpop.permute.xlu0 %69
    %71 = vset.pattern.permute.xlu0 0
    %72 = vperm.xlu0 %71, %v33
    %v73 = vpop.permute.xlu0 %72
    %74 = vset.pattern.permute.xlu0 0
    %75 = vperm.xlu0 %74, %v34
    %v76 = vpop.permute.xlu0 %75
    %77 = vset.pattern.permute.xlu0 0
    %78 = vperm.xlu0 %77, %v35
    %v79 = vpop.permute.xlu0 %78
    %80 = vset.pattern.permute.xlu0 0
    %81 = vperm.xlu0 %80, %v36
    %v82 = vpop.permute.xlu0 %81
    %83 = vset.pattern.permute.xlu0 0
    %84 = vperm.xlu0 %83, %v37
    %v85 = vpop.permute.xlu0 %84
    %vm86 = vcmp.eq.s32.totalorder %v21, %v40
    %vm87 = vcmp.eq.s32.totalorder %v21, %v43
    %vm88 = vcmp.eq.s32.totalorder %v21, %v46
    %vm89 = vcmp.eq.s32.totalorder %v21, %v49
    %vm90 = vcmp.eq.s32.totalorder %v21, %v52
    %vm91 = vcmp.eq.s32.totalorder %v21, %v55
    %vm92 = vcmp.eq.s32.totalorder %v21, %v58
    %vm93 = vcmp.eq.s32.totalorder %v21, %v61
    %vm94 = vcmp.eq.s32.totalorder %v21, %v64
    %vm95 = vcmp.eq.s32.totalorder %v21, %v67
    %vm96 = vcmp.eq.s32.totalorder %v21, %v70
    %vm97 = vcmp.eq.s32.totalorder %v21, %v73
    %vm98 = vcmp.eq.s32.totalorder %v21, %v76
    %vm99 = vcmp.eq.s32.totalorder %v21, %v79
    %vm100 = vcmp.eq.s32.totalorder %v21, %v82
    %vm101 = vcmp.eq.s32.totalorder %v21, %v85
    %v102 = vsel %vm86, 1, 0
    %v103 = vsel %vm87, 1, 0
    %v104 = vsel %vm88, 1, 0
    %v105 = vsel %vm89, 1, 0
    %v106 = vsel %vm90, 1, 0
    %v107 = vsel %vm91, 1, 0
    %v108 = vsel %vm92, 1, 0
    %v109 = vsel %vm93, 1, 0
    %v110 = vsel %vm94, 1, 0
    %v111 = vsel %vm95, 1, 0
    %v112 = vsel %vm96, 1, 0
    %v113 = vsel %vm97, 1, 0
    %v114 = vsel %vm98, 1, 0
    %v115 = vsel %vm99, 1, 0
    %v116 = vsel %vm100, 1, 0
    %v117 = vsel %vm101, 1, 0
    %v118 = vcvt.s32.f32 %v102
    %v119 = vcvt.s32.f32 %v103
    %v120 = vcvt.s32.f32 %v104
    %v121 = vcvt.s32.f32 %v105
    %v122 = vcvt.s32.f32 %v106
    %v123 = vcvt.s32.f32 %v107
    %v124 = vcvt.s32.f32 %v108
    %v125 = vcvt.s32.f32 %v109
    %v126 = vcvt.s32.f32 %v110
    %v127 = vcvt.s32.f32 %v111
    %v128 = vcvt.s32.f32 %v112
    %v129 = vcvt.s32.f32 %v113
    %v130 = vcvt.s32.f32 %v114
    %v131 = vcvt.s32.f32 %v115
    %v132 = vcvt.s32.f32 %v116
    %v133 = vcvt.s32.f32 %v117
    %134 = vset.pattern.permute.xlu0 1
    %135 = vperm.xlu0 %134, %v22
    %v136 = vpop.permute.xlu0 %135
    %137 = vset.pattern.permute.xlu0 1
    %138 = vperm.xlu0 %137, %v23
    %v139 = vpop.permute.xlu0 %138
    %140 = vset.pattern.permute.xlu0 1
    %141 = vperm.xlu0 %140, %v24
    %v142 = vpop.permute.xlu0 %141
    %143 = vset.pattern.permute.xlu0 1
    %144 = vperm.xlu0 %143, %v25
    %v145 = vpop.permute.xlu0 %144
    %146 = vset.pattern.permute.xlu0 1
    %147 = vperm.xlu0 %146, %v26
    %v148 = vpop.permute.xlu0 %147
    %149 = vset.pattern.permute.xlu0 1
    %150 = vperm.xlu0 %149, %v27
    %v151 = vpop.permute.xlu0 %150
    %152 = vset.pattern.permute.xlu0 1
    %153 = vperm.xlu0 %152, %v28
    %v154 = vpop.permute.xlu0 %153
    %155 = vset.pattern.permute.xlu0 1
    %156 = vperm.xlu0 %155, %v29
    %v157 = vpop.permute.xlu0 %156
    %158 = vset.pattern.permute.xlu0 1
    %159 = vperm.xlu0 %158, %v30
    %v160 = vpop.permute.xlu0 %159
    %161 = vset.pattern.permute.xlu0 1
    %162 = vperm.xlu0 %161, %v31
    %v163 = vpop.permute.xlu0 %162
    %164 = vset.pattern.permute.xlu0 1
    %165 = vperm.xlu0 %164, %v32
    %v166 = vpop.permute.xlu0 %165
    %167 = vset.pattern.permute.xlu0 1
    %168 = vperm.xlu0 %167, %v33
    %v169 = vpop.permute.xlu0 %168
    %170 = vset.pattern.permute.xlu0 1
    %171 = vperm.xlu0 %170, %v34
    %v172 = vpop.permute.xlu0 %171
    %173 = vset.pattern.permute.xlu0 1
    %174 = vperm.xlu0 %173, %v35
    %v175 = vpop.permute.xlu0 %174
    %176 = vset.pattern.permute.xlu0 1
    %177 = vperm.xlu0 %176, %v36
    %v178 = vpop.permute.xlu0 %177
    %179 = vset.pattern.permute.xlu0 1
    %180 = vperm.xlu0 %179, %v37
    %v181 = vpop.permute.xlu0 %180
    %vm182 = vcmp.eq.s32.totalorder %v21, %v136
    %vm183 = vcmp.eq.s32.totalorder %v21, %v139
    %vm184 = vcmp.eq.s32.totalorder %v21, %v142
    %vm185 = vcmp.eq.s32.totalorder %v21, %v145
    %vm186 = vcmp.eq.s32.totalorder %v21, %v148
    %vm187 = vcmp.eq.s32.totalorder %v21, %v151
    %vm188 = vcmp.eq.s32.totalorder %v21, %v154
    %vm189 = vcmp.eq.s32.totalorder %v21, %v157
    %vm190 = vcmp.eq.s32.totalorder %v21, %v160
    %vm191 = vcmp.eq.s32.totalorder %v21, %v163
    %vm192 = vcmp.eq.s32.totalorder %v21, %v166
    %vm193 = vcmp.eq.s32.totalorder %v21, %v169
    %vm194 = vcmp.eq.s32.totalorder %v21, %v172
    %vm195 = vcmp.eq.s32.totalorder %v21, %v175
    %vm196 = vcmp.eq.s32.totalorder %v21, %v178
    %vm197 = vcmp.eq.s32.totalorder %v21, %v181
    %v198 = vsel %vm182, 1, 0
    %v199 = vsel %vm183, 1, 0
    %v200 = vsel %vm184, 1, 0
    %v201 = vsel %vm185, 1, 0
    %v202 = vsel %vm186, 1, 0
    %v203 = vsel %vm187, 1, 0
    %v204 = vsel %vm188, 1, 0
    %v205 = vsel %vm189, 1, 0
    %v206 = vsel %vm190, 1, 0
    %v207 = vsel %vm191, 1, 0
    %v208 = vsel %vm192, 1, 0
    %v209 = vsel %vm193, 1, 0
    %v210 = vsel %vm194, 1, 0
    %v211 = vsel %vm195, 1, 0
    %v212 = vsel %vm196, 1, 0
    %v213 = vsel %vm197, 1, 0
    %v214 = vcvt.s32.f32 %v198
    %v215 = vcvt.s32.f32 %v199
    %v216 = vcvt.s32.f32 %v200
    %v217 = vcvt.s32.f32 %v201
    %v218 = vcvt.s32.f32 %v202
    %v219 = vcvt.s32.f32 %v203
    %v220 = vcvt.s32.f32 %v204
    %v221 = vcvt.s32.f32 %v205
    %v222 = vcvt.s32.f32 %v206
    %v223 = vcvt.s32.f32 %v207
    %v224 = vcvt.s32.f32 %v208
    %v225 = vcvt.s32.f32 %v209
    %v226 = vcvt.s32.f32 %v210
    %v227 = vcvt.s32.f32 %v211
    %v228 = vcvt.s32.f32 %v212
    %v229 = vcvt.s32.f32 %v213
    %vm230 = vcmask 523264
    %v232 = vsel %vm230, %v118, 0
    %v235 = vsel %vm230, %v119, 0
    %v238 = vsel %vm230, %v120, 0
    %v241 = vsel %vm230, %v121, 0
    %v244 = vsel %vm230, %v122, 0
    %v247 = vsel %vm230, %v123, 0
    %v250 = vsel %vm230, %v124, 0
    %v253 = vsel %vm230, %v125, 0
    %v256 = vsel %vm230, %v126, 0
    %v259 = vsel %vm230, %v127, 0
    %v262 = vsel %vm230, %v128, 0
    %v265 = vsel %vm230, %v129, 0
    %v268 = vsel %vm230, %v130, 0
    %v271 = vsel %vm230, %v131, 0
    %v274 = vsel %vm230, %v132, 0
    %v277 = vsel %vm230, %v133, 0
    %279 = vmatprep.subr.mxu0 0.0
    %280 = vmatpush1.msra.mxu0 %v12
    %281 = vmatprep.subr.mxu0 0.0
    %282 = vmatpush1.msra.mxu0 %v13
    %283 = vmatprep.subr.mxu0 0.0
    %284 = vmatpush1.msra.mxu0 %v14
    %285 = vmatprep.subr.mxu0 0.0
    %286 = vmatpush1.msra.mxu0 %v15
    %287 = vmatprep.subr.mxu0 0.0
    %288 = vmatpush1.msra.mxu0 %v16
    %289 = vmatprep.subr.mxu0 0.0
    %290 = vmatpush1.msra.mxu0 %v17
    %291 = vmatprep.subr.mxu0 0.0
    %292 = vmatpush1.msra.mxu0 %v18
    %293 = vmatprep.subr.mxu0 0.0
    %294 = vmatpush1.msra.mxu0 %v19
    %295 = vmatprep.subr.mxu0 0.0
    %296 = vmatpush1.msra.mxu0 0.0
    %297 = vmatprep.subr.mxu0 0.0
    %298 = vmatpush1.msra.mxu0 0.0
    %299 = vmatprep.subr.mxu0 0.0
    %300 = vmatpush1.msra.mxu0 0.0
    %301 = vmatprep.subr.mxu0 0.0
    %302 = vmatpush1.msra.mxu0 0.0
    %303 = vmatprep.subr.mxu0 0.0
    %304 = vmatpush1.msra.mxu0 0.0
    %305 = vmatprep.subr.mxu0 0.0
    %306 = vmatpush1.msra.mxu0 0.0
    %307 = vmatprep.subr.mxu0 0.0
    %308 = vmatpush1.msra.mxu0 0.0
    %309 = vmatprep.subr.mxu0 0.0
    %310 = vmatpush1.msra.mxu0 0.0
    %311 = vmatprep.subr.mxu0 0.0
    %312 = vmatpush1.msra.mxu0 0.0
    %313 = vmatprep.subr.mxu0 0.0
    %314 = vmatpush1.msra.mxu0 0.0
    %315 = vmatprep.subr.mxu0 0.0
    %316 = vmatpush1.msra.mxu0 0.0
    %317 = vmatprep.subr.mxu0 0.0
    %318 = vmatpush1.msra.mxu0 0.0
    %319 = vmatprep.subr.mxu0 0.0
    %320 = vmatpush1.msra.mxu0 0.0
    %321 = vmatprep.subr.mxu0 0.0
    %322 = vmatpush1.msra.mxu0 0.0
    %323 = vmatprep.subr.mxu0 0.0
    %324 = vmatpush1.msra.mxu0 0.0
    %325 = vmatprep.subr.mxu0 0.0
    %326 = vmatpush1.msra.mxu0 0.0
    %327 = vmatprep.subr.mxu0 0.0
    %328 = vmatpush1.msra.mxu0 0.0
    %329 = vmatprep.subr.mxu0 0.0
    %330 = vmatpush1.msra.mxu0 0.0
    %331 = vmatprep.subr.mxu0 0.0
    %332 = vmatpush1.msra.mxu0 0.0
    %333 = vmatprep.subr.mxu0 0.0
    %334 = vmatpush1.msra.mxu0 0.0
    %335 = vmatprep.subr.mxu0 0.0
    %336 = vmatpush1.msra.mxu0 0.0
    %337 = vmatprep.subr.mxu0 0.0
    %338 = vmatpush1.msra.mxu0 0.0
    %339 = vmatprep.subr.mxu0 0.0
    %340 = vmatpush1.msra.mxu0 0.0
    %341 = vmatprep.subr.mxu0 0.0
    %342 = vmatpush1.msra.mxu0 0.0
    %343 = vmatprep.mubr.f32.mxu0 0.0
    %344 = vmatmul.mubr.f32.gmra.mrb[0].mxu0 %v232
    %v345 = vpop.f32.mrb[0].mxu0
    %v346 = vadd.f32 0.0, %v345
    %v347 = vpop.f32.mrb[0].mxu0
    %348 = vmatprep.mubr.f32.mxu0 0.0
    %349 = vmatmul.mubr.f32.gmra.mrb[0].mxu0 %v235
    %v350 = vpop.f32.mrb[0].mxu0
    %v351 = vadd.f32 0.0, %v350
    %v352 = vpop.f32.mrb[0].mxu0
    %353 = vmatprep.mubr.f32.mxu0 0.0
    %354 = vmatmul.mubr.f32.gmra.mrb[0].mxu0 %v238
    %v355 = vpop.f32.mrb[0].mxu0
    %v356 = vadd.f32 0.0, %v355
    %v357 = vpop.f32.mrb[0].mxu0
    %358 = vmatprep.mubr.f32.mxu0 0.0
    %359 = vmatmul.mubr.f32.gmra.mrb[0].mxu0 %v241
    %v360 = vpop.f32.mrb[0].mxu0
    %v361 = vadd.f32 0.0, %v360
    %v362 = vpop.f32.mrb[0].mxu0
    %363 = vmatprep.mubr.f32.mxu0 0.0
    %364 = vmatmul.mubr.f32.gmra.mrb[0].mxu0 %v244
    %v365 = vpop.f32.mrb[0].mxu0
    %v366 = vadd.f32 0.0, %v365
    %v367 = vpop.f32.mrb[0].mxu0
    %368 = vmatprep.mubr.f32.mxu0 0.0
    %369 = vmatmul.mubr.f32.gmra.mrb[0].mxu0 %v247
    %v370 = vpop.f32.mrb[0].mxu0
    %v371 = vadd.f32 0.0, %v370
    %v372 = vpop.f32.mrb[0].mxu0
    %373 = vmatprep.mubr.f32.mxu0 0.0
    %374 = vmatmul.mubr.f32.gmra.mrb[0].mxu0 %v250
    %v375 = vpop.f32.mrb[0].mxu0
    %v376 = vadd.f32 0.0, %v375
    %v377 = vpop.f32.mrb[0].mxu0
    %378 = vmatprep.mubr.f32.mxu0 0.0
    %379 = vmatmul.mubr.f32.gmra.mrb[0].mxu0 %v253
    %v380 = vpop.f32.mrb[0].mxu0
    %v381 = vadd.f32 0.0, %v380
    %v382 = vpop.f32.mrb[0].mxu0
    %383 = vmatprep.mubr.f32.mxu0 0.0
    %384 = vmatmul.mubr.f32.gmra.mrb[0].mxu0 %v256
    %v385 = vpop.f32.mrb[0].mxu0
    %v386 = vadd.f32 0.0, %v385
    %v387 = vpop.f32.mrb[0].mxu0
    %388 = vmatprep.mubr.f32.mxu0 0.0
    %389 = vmatmul.mubr.f32.gmra.mrb[0].mxu0 %v259
    %v390 = vpop.f32.mrb[0].mxu0
    %v391 = vadd.f32 0.0, %v390
    %v392 = vpop.f32.mrb[0].mxu0
    %393 = vmatprep.mubr.f32.mxu0 0.0
    %394 = vmatmul.mubr.f32.gmra.mrb[0].mxu0 %v262
    %v395 = vpop.f32.mrb[0].mxu0
    %v396 = vadd.f32 0.0, %v395
    %v397 = vpop.f32.mrb[0].mxu0
    %398 = vmatprep.mubr.f32.mxu0 0.0
    %399 = vmatmul.mubr.f32.gmra.mrb[0].mxu0 %v265
    %v400 = vpop.f32.mrb[0].mxu0
    %v401 = vadd.f32 0.0, %v400
    %v402 = vpop.f32.mrb[0].mxu0
    %403 = vmatprep.mubr.f32.mxu0 0.0
    %404 = vmatmul.mubr.f32.gmra.mrb[0].mxu0 %v268
    %v405 = vpop.f32.mrb[0].mxu0
    %v406 = vadd.f32 0.0, %v405
    %v407 = vpop.f32.mrb[0].mxu0
    %408 = vmatprep.mubr.f32.mxu0 0.0
    %409 = vmatmul.mubr.f32.gmra.mrb[0].mxu0 %v271
    %v410 = vpop.f32.mrb[0].mxu0
    %v411 = vadd.f32 0.0, %v410
    %v412 = vpop.f32.mrb[0].mxu0
    %413 = vmatprep.mubr.f32.mxu0 0.0
    %414 = vmatmul.mubr.f32.gmra.mrb[0].mxu0 %v274
    %v415 = vpop.f32.mrb[0].mxu0
    %v416 = vadd.f32 0.0, %v415
    %v417 = vpop.f32.mrb[0].mxu0
    %418 = vmatprep.mubr.f32.mxu0 0.0
    %419 = vmatmul.mubr.f32.gmra.mrb[0].mxu0 %v277
    %v420 = vpop.f32.mrb[0].mxu0
    %v421 = vadd.f32 0.0, %v420
    %v422 = vpop.f32.mrb[0].mxu0
    %423 = vdwg.mxu0
    %v425 = vsel %vm230, %v214, 0
    %v428 = vsel %vm230, %v215, 0
    %v431 = vsel %vm230, %v216, 0
    %v434 = vsel %vm230, %v217, 0
    %v437 = vsel %vm230, %v218, 0
    %v440 = vsel %vm230, %v219, 0
    %v443 = vsel %vm230, %v220, 0
    %v446 = vsel %vm230, %v221, 0
    %v449 = vsel %vm230, %v222, 0
    %v452 = vsel %vm230, %v223, 0
    %v455 = vsel %vm230, %v224, 0
    %v458 = vsel %vm230, %v225, 0
    %v461 = vsel %vm230, %v226, 0
    %v464 = vsel %vm230, %v227, 0
    %v467 = vsel %vm230, %v228, 0
    %v470 = vsel %vm230, %v229, 0
    %472 = vmatprep.subr.mxu0 0.0
    %473 = vmatpush1.msra.mxu0 %v12
    %474 = vmatprep.subr.mxu0 0.0
    %475 = vmatpush1.msra.mxu0 %v13
    %476 = vmatprep.subr.mxu0 0.0
    %477 = vmatpush1.msra.mxu0 %v14
    %478 = vmatprep.subr.mxu0 0.0
    %479 = vmatpush1.msra.mxu0 %v15
    %480 = vmatprep.subr.mxu0 0.0
    %481 = vmatpush1.msra.mxu0 %v16
    %482 = vmatprep.subr.mxu0 0.0
    %483 = vmatpush1.msra.mxu0 %v17
    %484 = vmatprep.subr.mxu0 0.0
    %485 = vmatpush1.msra.mxu0 %v18
    %486 = vmatprep.subr.mxu0 0.0
    %487 = vmatpush1.msra.mxu0 %v19
    %488 = vmatprep.subr.mxu0 0.0
    %489 = vmatpush1.msra.mxu0 0.0
    %490 = vmatprep.subr.mxu0 0.0
    %491 = vmatpush1.msra.mxu0 0.0
    %492 = vmatprep.subr.mxu0 0.0
    %493 = vmatpush1.msra.mxu0 0.0
    %494 = vmatprep.subr.mxu0 0.0
    %495 = vmatpush1.msra.mxu0 0.0
    %496 = vmatprep.subr.mxu0 0.0
    %497 = vmatpush1.msra.mxu0 0.0
    %498 = vmatprep.subr.mxu0 0.0
    %499 = vmatpush1.msra.mxu0 0.0
    %500 = vmatprep.subr.mxu0 0.0
    %501 = vmatpush1.msra.mxu0 0.0
    %502 = vmatprep.subr.mxu0 0.0
    %503 = vmatpush1.msra.mxu0 0.0
    %504 = vmatprep.subr.mxu0 0.0
    %505 = vmatpush1.msra.mxu0 0.0
    %506 = vmatprep.subr.mxu0 0.0
    %507 = vmatpush1.msra.mxu0 0.0
    %508 = vmatprep.subr.mxu0 0.0
    %509 = vmatpush1.msra.mxu0 0.0
    %510 = vmatprep.subr.mxu0 0.0
    %511 = vmatpush1.msra.mxu0 0.0
    %512 = vmatprep.subr.mxu0 0.0
    %513 = vmatpush1.msra.mxu0 0.0
    %514 = vmatprep.subr.mxu0 0.0
    %515 = vmatpush1.msra.mxu0 0.0
    %516 = vmatprep.subr.mxu0 0.0
    %517 = vmatpush1.msra.mxu0 0.0
    %518 = vmatprep.subr.mxu0 0.0
    %519 = vmatpush1.msra.mxu0 0.0
    %520 = vmatprep.subr.mxu0 0.0
    %521 = vmatpush1.msra.mxu0 0.0
    %522 = vmatprep.subr.mxu0 0.0
    %523 = vmatpush1.msra.mxu0 0.0
    %524 = vmatprep.subr.mxu0 0.0
    %525 = vmatpush1.msra.mxu0 0.0
    %526 = vmatprep.subr.mxu0 0.0
    %527 = vmatpush1.msra.mxu0 0.0
    %528 = vmatprep.subr.mxu0 0.0
    %529 = vmatpush1.msra.mxu0 0.0
    %530 = vmatprep.subr.mxu0 0.0
    %531 = vmatpush1.msra.mxu0 0.0
    %532 = vmatprep.subr.mxu0 0.0
    %533 = vmatpush1.msra.mxu0 0.0
    %534 = vmatprep.subr.mxu0 0.0
    %535 = vmatpush1.msra.mxu0 0.0
    %536 = vmatprep.mubr.f32.mxu0 0.0
    %537 = vmatmul.mubr.f32.gmra.mrb[0].mxu0 %v425
    %v538 = vpop.f32.mrb[0].mxu0
    %v539 = vadd.f32 0.0, %v538
    %v540 = vpop.f32.mrb[0].mxu0
    %541 = vmatprep.mubr.f32.mxu0 0.0
    %542 = vmatmul.mubr.f32.gmra.mrb[0].mxu0 %v428
    %v543 = vpop.f32.mrb[0].mxu0
    %v544 = vadd.f32 0.0, %v543
    %v545 = vpop.f32.mrb[0].mxu0
    %546 = vmatprep.mubr.f32.mxu0 0.0
    %547 = vmatmul.mubr.f32.gmra.mrb[0].mxu0 %v431
    %v548 = vpop.f32.mrb[0].mxu0
    %v549 = vadd.f32 0.0, %v548
    %v550 = vpop.f32.mrb[0].mxu0
    %551 = vmatprep.mubr.f32.mxu0 0.0
    %552 = vmatmul.mubr.f32.gmra.mrb[0].mxu0 %v434
    %v553 = vpop.f32.mrb[0].mxu0
    %v554 = vadd.f32 0.0, %v553
    %v555 = vpop.f32.mrb[0].mxu0
    %556 = vmatprep.mubr.f32.mxu0 0.0
    %557 = vmatmul.mubr.f32.gmra.mrb[0].mxu0 %v437
    %v558 = vpop.f32.mrb[0].mxu0
    %v559 = vadd.f32 0.0, %v558
    %v560 = vpop.f32.mrb[0].mxu0
    %561 = vmatprep.mubr.f32.mxu0 0.0
    %562 = vmatmul.mubr.f32.gmra.mrb[0].mxu0 %v440
    %v563 = vpop.f32.mrb[0].mxu0
    %v564 = vadd.f32 0.0, %v563
    %v565 = vpop.f32.mrb[0].mxu0
    %566 = vmatprep.mubr.f32.mxu0 0.0
    %567 = vmatmul.mubr.f32.gmra.mrb[0].mxu0 %v443
    %v568 = vpop.f32.mrb[0].mxu0
    %v569 = vadd.f32 0.0, %v568
    %v570 = vpop.f32.mrb[0].mxu0
    %571 = vmatprep.mubr.f32.mxu0 0.0
    %572 = vmatmul.mubr.f32.gmra.mrb[0].mxu0 %v446
    %v573 = vpop.f32.mrb[0].mxu0
    %v574 = vadd.f32 0.0, %v573
    %v575 = vpop.f32.mrb[0].mxu0
    %576 = vmatprep.mubr.f32.mxu0 0.0
    %577 = vmatmul.mubr.f32.gmra.mrb[0].mxu0 %v449
    %v578 = vpop.f32.mrb[0].mxu0
    %v579 = vadd.f32 0.0, %v578
    %v580 = vpop.f32.mrb[0].mxu0
    %581 = vmatprep.mubr.f32.mxu0 0.0
    %582 = vmatmul.mubr.f32.gmra.mrb[0].mxu0 %v452
    %v583 = vpop.f32.mrb[0].mxu0
    %v584 = vadd.f32 0.0, %v583
    %v585 = vpop.f32.mrb[0].mxu0
    %586 = vmatprep.mubr.f32.mxu0 0.0
    %587 = vmatmul.mubr.f32.gmra.mrb[0].mxu0 %v455
    %v588 = vpop.f32.mrb[0].mxu0
    %v589 = vadd.f32 0.0, %v588
    %v590 = vpop.f32.mrb[0].mxu0
    %591 = vmatprep.mubr.f32.mxu0 0.0
    %592 = vmatmul.mubr.f32.gmra.mrb[0].mxu0 %v458
    %v593 = vpop.f32.mrb[0].mxu0
    %v594 = vadd.f32 0.0, %v593
    %v595 = vpop.f32.mrb[0].mxu0
    %596 = vmatprep.mubr.f32.mxu0 0.0
    %597 = vmatmul.mubr.f32.gmra.mrb[0].mxu0 %v461
    %v598 = vpop.f32.mrb[0].mxu0
    %v599 = vadd.f32 0.0, %v598
    %v600 = vpop.f32.mrb[0].mxu0
    %601 = vmatprep.mubr.f32.mxu0 0.0
    %602 = vmatmul.mubr.f32.gmra.mrb[0].mxu0 %v464
    %v603 = vpop.f32.mrb[0].mxu0
    %v604 = vadd.f32 0.0, %v603
    %v605 = vpop.f32.mrb[0].mxu0
    %606 = vmatprep.mubr.f32.mxu0 0.0
    %607 = vmatmul.mubr.f32.gmra.mrb[0].mxu0 %v467
    %v608 = vpop.f32.mrb[0].mxu0
    %v609 = vadd.f32 0.0, %v608
    %v610 = vpop.f32.mrb[0].mxu0
    %611 = vmatprep.mubr.f32.mxu0 0.0
    %612 = vmatmul.mubr.f32.gmra.mrb[0].mxu0 %v470
    %v613 = vpop.f32.mrb[0].mxu0
    %v614 = vadd.f32 0.0, %v613
    %v615 = vpop.f32.mrb[0].mxu0
    %616 = vdwg.mxu0
    %v617 = vmul.f32 %v346, %v539
    %v618 = vmul.f32 %v351, %v544
    %v619 = vmul.f32 %v356, %v549
    %v620 = vmul.f32 %v361, %v554
    %v621 = vmul.f32 %v366, %v559
    %v622 = vmul.f32 %v371, %v564
    %v623 = vmul.f32 %v376, %v569
    %v624 = vmul.f32 %v381, %v574
    %v625 = vmul.f32 %v386, %v579
    %v626 = vmul.f32 %v391, %v584
    %v627 = vmul.f32 %v396, %v589
    %v628 = vmul.f32 %v401, %v594
    %v629 = vmul.f32 %v406, %v599
    %v630 = vmul.f32 %v411, %v604
    %v631 = vmul.f32 %v416, %v609
    %v632 = vmul.f32 %v421, %v614
    %633 = vmatprep.subr.mxu0 0.0
    %634 = vmatpush1.xpose.msra.mxu0 %v617
    %635 = vmatprep.subr.mxu0 0.0
    %636 = vmatpush1.xpose.msra.mxu0 %v618
    %637 = vmatprep.subr.mxu0 0.0
    %638 = vmatpush1.xpose.msra.mxu0 %v619
    %639 = vmatprep.subr.mxu0 0.0
    %640 = vmatpush1.xpose.msra.mxu0 %v620
    %641 = vmatprep.subr.mxu0 0.0
    %642 = vmatpush1.xpose.msra.mxu0 %v621
    %643 = vmatprep.subr.mxu0 0.0
    %644 = vmatpush1.xpose.msra.mxu0 %v622
    %645 = vmatprep.subr.mxu0 0.0
    %646 = vmatpush1.xpose.msra.mxu0 %v623
    %647 = vmatprep.subr.mxu0 0.0
    %648 = vmatpush1.xpose.msra.mxu0 %v624
    %649 = vmatprep.subr.mxu0 0.0
    %650 = vmatpush1.xpose.msra.mxu0 %v625
    %651 = vmatprep.subr.mxu0 0.0
    %652 = vmatpush1.xpose.msra.mxu0 %v626
    %653 = vmatprep.subr.mxu0 0.0
    %654 = vmatpush1.xpose.msra.mxu0 %v627
    %655 = vmatprep.subr.mxu0 0.0
    %656 = vmatpush1.xpose.msra.mxu0 %v628
    %657 = vmatprep.subr.mxu0 0.0
    %658 = vmatpush1.xpose.msra.mxu0 %v629
    %659 = vmatprep.subr.mxu0 0.0
    %660 = vmatpush1.xpose.msra.mxu0 %v630
    %661 = vmatprep.subr.mxu0 0.0
    %662 = vmatpush1.xpose.msra.mxu0 %v631
    %663 = vmatprep.subr.mxu0 0.0
    %664 = vmatpush1.xpose.msra.mxu0 %v632
    %665 = vmatprep.subr.mxu0 0.0
    %666 = vmatpush1.xpose.msra.mxu0 0.0
    %667 = vmatprep.subr.mxu0 0.0
    %668 = vmatpush1.xpose.msra.mxu0 0.0
    %669 = vmatprep.subr.mxu0 0.0
    %670 = vmatpush1.xpose.msra.mxu0 0.0
    %671 = vmatprep.subr.mxu0 0.0
    %672 = vmatpush1.xpose.msra.mxu0 0.0
    %673 = vmatprep.subr.mxu0 0.0
    %674 = vmatpush1.xpose.msra.mxu0 0.0
    %675 = vmatprep.subr.mxu0 0.0
    %676 = vmatpush1.xpose.msra.mxu0 0.0
    %677 = vmatprep.subr.mxu0 0.0
    %678 = vmatpush1.xpose.msra.mxu0 0.0
    %679 = vmatprep.subr.mxu0 0.0
    %680 = vmatpush1.xpose.msra.mxu0 0.0
    %681 = vmatprep.subr.mxu0 0.0
    %682 = vmatpush1.xpose.msra.mxu0 0.0
    %683 = vmatprep.subr.mxu0 0.0
    %684 = vmatpush1.xpose.msra.mxu0 0.0
    %685 = vmatprep.subr.mxu0 0.0
    %686 = vmatpush1.xpose.msra.mxu0 0.0
    %687 = vmatprep.subr.mxu0 0.0
    %688 = vmatpush1.xpose.msra.mxu0 0.0
    %689 = vmatprep.subr.mxu0 0.0
    %690 = vmatpush1.xpose.msra.mxu0 0.0
    %691 = vmatprep.subr.mxu0 0.0
    %692 = vmatpush1.xpose.msra.mxu0 0.0
    %693 = vmatprep.subr.mxu0 0.0
    %694 = vmatpush1.xpose.msra.mxu0 0.0
    %695 = vmatprep.subr.mxu0 0.0
    %696 = vmatpush1.xpose.msra.mxu0 0.0
    %697 = vmatprep.mubr.f32.mxu0 0.0
    %698 = vmatmul.mubr.f32.gmra.mrb[0].mxu0 1.0
    %v699 = vpop.f32.mrb[0].mxu0
    %v700 = vadd.f32 0.0, %v699
    %v701 = vpop.f32.mrb[0].mxu0
    %702 = vdwg.mxu0
    %v703 = vxor.u32 %v700, 2147483648
    %v704 = vmul.f32 %v703, 1.442695
    %v705 = vpow.pop %v704
    %v706 = vadd.f32 %v705, 1.0
    %v707 = vrcp.pop %v706
    %v708 = vmul.f32 1.0, %v707
    %709 = vst [vmem:[#allocation2] sm:$0x1] %v708
    // Predicated region
    $region10: #{tpu_custom_call.1} parent=1 // pred_check
      _
    $region11: #{tpu_custom_call.1} parent=1 // pred_check_branch
      %711 = sbr.rel (0) target = $region13
    $region12: #{tpu_custom_call.1} parent=1 // pred_region
      %s713 = ssub.s32 16, 16
      %714 = vsyncadd [#allocation3], %s713
      %s716 = sshll.u32 [#allocation2], 4
      %s717 = int_to_ptr.vmem [resolvable:$true] %s716
      %719 = dma.vmem_to_hbm [thread:$0]  %s717, 16, %s2, [#allocation3]
    $region13: #{tpu_custom_call.1} parent=1 // pred_fallthru
      _
    // Predicated region
    $region14: #{tpu_custom_call.1} parent=1 // pred_check
      _
    $region15: #{tpu_custom_call.1} parent=1 // pred_check_branch
      %721 = sbr.rel (0) target = $region17
    $region16: #{tpu_custom_call.1} parent=1 // pred_region
      %722 = dma.done [#allocation3], 16
    $region17: #{tpu_custom_call.1} parent=1 // pred_fallthru
      _
    %723 = vsyncpa [#allocation3], 1

</llo_original>
